<compile_context>
chip_gen: v6e
topology: v6e:2x2x1
jax: 0.10.0
libtpu: 0.0.40
codegen_flags: <defaults>
</compile_context>

<pallas_src>
import jax
import jax.numpy as jnp
from jax.experimental import pallas as pl
from jax.experimental.pallas import tpu as pltpu

_LANE = 128      # vreg lane width
_SUBLANE = 8     # vreg sublane count (f32)


def _round_up(n, m):
    return ((n + m - 1) // m) * m


def _padded_hidden(h):
    # Lane-dense (128-aligned) hidden/output dim when padding is cheap; for
    # small H (< 128) keep full-dim blocks and accept masked stores instead
    # of multiplying the output stream.
    if h % _LANE == 0 or h < _LANE:
        return h
    return _round_up(h, _LANE)


def _state_encoder_kernel(x_ref, w1_ref, b1_ref, w2_ref, b2_ref, o_ref):
    # Two fused MXU matmuls with f32 accumulation; bias-add + ReLU on the VPU.
    # The hidden activation never leaves VMEM (no HBM round trip).
    x = x_ref[...].astype(w1_ref.dtype)          # in-kernel cast (no wrapper pass)
    h = jnp.dot(x, w1_ref[...], preferred_element_type=jnp.float32)
    h = jnp.maximum(h + b1_ref[...].astype(jnp.float32), 0.0)
    # If weights are bf16 the f32 accumulator is downcast for the second MXU
    # pass (documented small divergence from a pure-f32 reference).
    o = jnp.dot(h.astype(w2_ref.dtype), w2_ref[...],
                preferred_element_type=jnp.float32)
    o = jnp.maximum(o + b2_ref[...].astype(jnp.float32), 0.0)
    o_ref[...] = o.astype(o_ref.dtype)


def prepare_params(w1, b1, w2, b2, *, compute_dtype=None):
    """One-time preprocessing (call at init): pad hidden dim, cast to MXU dtype.

    w1: (S, H); b1: (H,) or (1, H); w2: (H, H); b2: (H,) or (1, H).
    Zero-padded weight rows/cols + ReLU(0)=0 keep padded lanes exactly zero,
    so slicing the output back to H is exact.
    """
    S, H = w1.shape
    assert w2.shape == (H, H)
    if compute_dtype is None:
        compute_dtype = w1.dtype
    compute_dtype = jnp.dtype(compute_dtype)
    Hp = _padded_hidden(H)
    ph = Hp - H
    b1 = jnp.reshape(b1, (1, H))
    b2 = jnp.reshape(b2, (1, H))
    return dict(
        w1=jnp.pad(w1, ((0, 0), (0, ph))).astype(compute_dtype),
        b1=jnp.pad(b1, ((0, 0), (0, ph))).astype(jnp.float32),
        w2=jnp.pad(w2, ((0, ph), (0, ph))).astype(compute_dtype),
        b2=jnp.pad(b2, ((0, 0), (0, ph))).astype(jnp.float32),
        state_dim=S, hidden=H, hidden_padded=Hp, compute_dtype=compute_dtype)


def state_encoder_forward(x, params, *, block_b=256, target_grid_steps=4):
    """Pallas equivalent of StateEncoder.forward: relu(relu(x@W1+b1)@W2+b2)."""
    B, S = x.shape
    assert S == params["state_dim"]
    H, Hp = params["hidden"], params["hidden_padded"]
    compute_dtype = params["compute_dtype"]
    out_dtype = x.dtype
    w1p, b1p, w2p, b2p = params["w1"], params["b1"], params["w2"], params["b2"]

    # Batch tile: sublane-aligned, capped so the grid has several steps
    # (pipeline overlap + both v7x TensorCores busy), but <= block_b rows
    # (M=256 already fills every generation's MXU; per-step overhead ~0.35us).
    TB = max(_SUBLANE,
             min(block_b, _round_up(pl.cdiv(B, target_grid_steps), _SUBLANE)))
    Bp = _round_up(B, TB)
    xp = x if Bp == B else jnp.pad(x, ((0, Bp - B), (0, 0)))
    grid = (Bp // TB,)

    x_isz = jnp.dtype(x.dtype).itemsize
    o_isz = jnp.dtype(out_dtype).itemsize
    cd_isz = compute_dtype.itemsize
    weight_bytes = (S * Hp + Hp * Hp) * cd_isz + 2 * Hp * 4
    # x/out tiles double-buffered, weights single-buffered, plus f32 hidden
    # activation / accumulators; 50% headroom + 2 MiB slack.
    vmem_need = (2 * TB * S * x_isz + 2 * TB * Hp * o_isz
                 + weight_bytes + 3 * TB * Hp * 4)
    vmem_limit = min(int(vmem_need * 1.5) + (2 << 20), 64 << 20)
    # TODO(synk): for very large H (resident W2 beyond ~16-24 MiB, esp. v7x's
    # 64 MiB VMEM) add a grid axis tiling the second matmul's N dim instead of
    # keeping W2 fully VMEM-resident.

    flops = 2 * Bp * (S * Hp + Hp * Hp)
    bytes_accessed = B * S * x_isz + weight_bytes + Bp * Hp * o_isz

    resident = dict(pipeline_mode=pl.Buffered(1))  # constant block -> 1 buffer

    out = pl.pallas_call(
        _state_encoder_kernel,
        out_shape=jax.ShapeDtypeStruct((Bp, Hp), out_dtype),
        grid_spec=pltpu.PrefetchScalarGridSpec(
            num_scalar_prefetch=0,
            grid=grid,
            in_specs=[
                # batch-streamed activation (double-buffered by Pallas)
                pl.BlockSpec((TB, S), lambda i: (i, 0)),
                # weights / biases: constant index_map, single-buffered,
                # DMA'd once and VMEM-resident for the whole grid
                pl.BlockSpec((S, Hp), lambda i: (0, 0), **resident),
                pl.BlockSpec((1, Hp), lambda i: (0, 0), **resident),
                pl.BlockSpec((Hp, Hp), lambda i: (0, 0), **resident),
                pl.BlockSpec((1, Hp), lambda i: (0, 0), **resident),
            ],
            out_specs=pl.BlockSpec((TB, Hp), lambda i: (i, 0)),
        ),
        compiler_params=pltpu.CompilerParams(
            dimension_semantics=("parallel",),   # megacore sharding on v7x
            vmem_limit_bytes=vmem_limit),
        cost_estimate=pl.CostEstimate(
            flops=flops, transcendentals=0, bytes_accessed=bytes_accessed),
    )(xp, w1p, b1p, w2p, b2p)

    if Bp != B or Hp != H:
        out = out[:B, :H]
    return out


def init_params(key, state_dim, hidden_size, dtype=jnp.float32):
    # Deterministic synthetic init mimicking nn.Linear's U(-1/sqrt(in), 1/sqrt(in)).
    k1, k2, k3, k4 = jax.random.split(key, 4)
    lim1 = 1.0 / jnp.sqrt(jnp.array(state_dim, dtype))
    lim2 = 1.0 / jnp.sqrt(jnp.array(hidden_size, dtype))
    w1 = jax.random.uniform(k1, (state_dim, hidden_size), dtype, -lim1, lim1)
    b1 = jax.random.uniform(k2, (1, hidden_size), dtype, -lim1, lim1)
    w2 = jax.random.uniform(k3, (hidden_size, hidden_size), dtype, -lim2, lim2)
    b2 = jax.random.uniform(k4, (1, hidden_size), dtype, -lim2, lim2)
    return w1, b1, w2, b2


def reference_forward(x, w1, b1, w2, b2):
    h = jnp.maximum(x @ w1 + b1, 0.0)
    return jnp.maximum(h @ w2 + b2, 0.0)


if __name__ == "__main__":
    key = jax.random.PRNGKey(0)
    kx, kp, kx2, kp2 = jax.random.split(key, 4)

    # Case 1: small hidden (no lane padding) — exact f32 path + bf16 MXU path.
    batch, state_dim, hidden = 8, 16, 32
    x = jax.random.normal(kx, (batch, state_dim), jnp.float32)
    w1, b1, w2, b2 = init_params(kp, state_dim, hidden)
    ref = reference_forward(x, w1, b1, w2, b2)

    params_f32 = prepare_params(w1, b1, w2, b2)
    out_f32 = jax.block_until_ready(state_encoder_forward(x, params_f32))
    assert out_f32.shape == (batch, hidden)
    assert jnp.allclose(out_f32, ref, atol=1e-5, rtol=1e-5)

    params_bf16 = prepare_params(w1, b1, w2, b2, compute_dtype=jnp.bfloat16)
    out_bf16 = jax.block_until_ready(state_encoder_forward(x, params_bf16))
    assert out_bf16.shape == (batch, hidden)
    assert jnp.allclose(out_bf16.astype(jnp.float32), ref, atol=1e-1, rtol=5e-2)

    # Case 2: hidden > 128 (lane-padded to 256) and batch not a tile multiple
    # (exercises pad + multi-step grid + final slice path).
    batch2, state_dim2, hidden2 = 40, 16, 160
    x2 = jax.random.normal(kx2, (batch2, state_dim2), jnp.float32)
    w1b, b1b, w2b, b2b = init_params(kp2, state_dim2, hidden2)
    ref2 = reference_forward(x2, w1b, b1b, w2b, b2b)
    params2 = prepare_params(w1b, b1b, w2b, b2b)
    out2 = jax.block_until_ready(state_encoder_forward(x2, params2))
    assert out2.shape == (batch2, hidden2)
    assert jnp.allclose(out2, ref2, atol=1e-4, rtol=1e-4)

    print("KERNEL_OK")
</pallas_src>

<mosaic_0001>
module attributes {stable_mosaic.version = 11 : i64} {
  func.func @_state_encoder_kernel(%arg0: i32, %arg1: memref<8x16xf32, #tpu.memory_space<vmem>>, %arg2: memref<16x32xf32, #tpu.memory_space<vmem>>, %arg3: memref<1x32xf32, #tpu.memory_space<vmem>>, %arg4: memref<32x32xf32, #tpu.memory_space<vmem>>, %arg5: memref<1x32xf32, #tpu.memory_space<vmem>>, %arg6: memref<8x32xf32, #tpu.memory_space<vmem>>) attributes {dimension_semantics = [#tpu.dimension_semantics<parallel>], iteration_bounds = array<i64: 1>, scalar_prefetch = 0 : i64, scratch_operands = 0 : i64, tpu.core_type = #tpu.core_type<tc>, window_params = [{transform_indices = @transform_0, window_bounds = array<i64: 8, 16>}, {pipeline_mode = #tpu.pipeline_mode<synchronous>, transform_indices = @transform_1, window_bounds = array<i64: 16, 32>}, {pipeline_mode = #tpu.pipeline_mode<synchronous>, transform_indices = @transform_2, window_bounds = array<i64: 1, 32>}, {pipeline_mode = #tpu.pipeline_mode<synchronous>, transform_indices = @transform_3, window_bounds = array<i64: 32, 32>}, {pipeline_mode = #tpu.pipeline_mode<synchronous>, transform_indices = @transform_4, window_bounds = array<i64: 1, 32>}, {transform_indices = @transform_5, window_bounds = array<i64: 8, 32>}]} {
    %c0 = arith.constant 0 : index
    %c0_0 = arith.constant 0 : index
    %0 = vector.load %arg1[%c0, %c0_0] : memref<8x16xf32, #tpu.memory_space<vmem>>, vector<8x16xf32>
    %c0_1 = arith.constant 0 : index
    %c0_2 = arith.constant 0 : index
    %1 = vector.load %arg2[%c0_1, %c0_2] : memref<16x32xf32, #tpu.memory_space<vmem>>, vector<16x32xf32>
    %cst = arith.constant dense<0.000000e+00> : vector<8x32xf32>
    %2 = tpu.matmul %0, %1, %cst {dimension_numbers = #tpu.dot_dimension_numbers<[1], [0], [0], [1], [0, 0, 1, 1], [], []>} : vector<8x16xf32>, vector<16x32xf32>, vector<8x32xf32> -> vector<8x32xf32>
    %c0_3 = arith.constant 0 : index
    %c0_4 = arith.constant 0 : index
    %3 = vector.load %arg3[%c0_3, %c0_4] : memref<1x32xf32, #tpu.memory_space<vmem>>, vector<1x32xf32>
    %4 = vector.broadcast %3 : vector<1x32xf32> to vector<8x32xf32>
    %5 = arith.addf %2, %4 : vector<8x32xf32>
    %cst_5 = arith.constant 0.000000e+00 : f32
    %6 = vector.broadcast %cst_5 : f32 to vector<8x32xf32>
    %7 = arith.maximumf %5, %6 : vector<8x32xf32>
    %c0_6 = arith.constant 0 : index
    %c0_7 = arith.constant 0 : index
    %8 = vector.load %arg4[%c0_6, %c0_7] : memref<32x32xf32, #tpu.memory_space<vmem>>, vector<32x32xf32>
    %cst_8 = arith.constant dense<0.000000e+00> : vector<8x32xf32>
    %9 = tpu.matmul %7, %8, %cst_8 {dimension_numbers = #tpu.dot_dimension_numbers<[1], [0], [0], [1], [0, 0, 1, 1], [], []>} : vector<8x32xf32>, vector<32x32xf32>, vector<8x32xf32> -> vector<8x32xf32>
    %c0_9 = arith.constant 0 : index
    %c0_10 = arith.constant 0 : index
    %10 = vector.load %arg5[%c0_9, %c0_10] : memref<1x32xf32, #tpu.memory_space<vmem>>, vector<1x32xf32>
    %11 = vector.broadcast %10 : vector<1x32xf32> to vector<8x32xf32>
    %12 = arith.addf %9, %11 : vector<8x32xf32>
    %cst_11 = arith.constant 0.000000e+00 : f32
    %13 = vector.broadcast %cst_11 : f32 to vector<8x32xf32>
    %14 = arith.maximumf %12, %13 : vector<8x32xf32>
    %c0_12 = arith.constant 0 : index
    %c0_13 = arith.constant 0 : index
    %15 = vector.load %arg6[%c0_12, %c0_13] : memref<8x32xf32, #tpu.memory_space<vmem>>, vector<8x32xf32>
    tpu.vector_store %arg6[%c0_12, %c0_13], %14 {strides = array<i32>} : memref<8x32xf32, #tpu.memory_space<vmem>>, vector<8x32xf32>,
    return
  }
  func.func @transform_0(%arg0: i32) -> (i32, i32) {
    %c0_i32 = arith.constant 0 : i32
    %c0_i32_0 = arith.constant 0 : i32
    return %arg0, %c0_i32 : i32, i32
  }
  func.func @transform_1(%arg0: i32) -> (i32, i32) {
    %c0_i32 = arith.constant 0 : i32
    %c0_i32_0 = arith.constant 0 : i32
    %c0_i32_1 = arith.constant 0 : i32
    return %c0_i32, %c0_i32_0 : i32, i32
  }
  func.func @transform_2(%arg0: i32) -> (i32, i32) {
    %c0_i32 = arith.constant 0 : i32
    %c0_i32_0 = arith.constant 0 : i32
    %c0_i32_1 = arith.constant 0 : i32
    return %c0_i32, %c0_i32_0 : i32, i32
  }
  func.func @transform_3(%arg0: i32) -> (i32, i32) {
    %c0_i32 = arith.constant 0 : i32
    %c0_i32_0 = arith.constant 0 : i32
    %c0_i32_1 = arith.constant 0 : i32
    return %c0_i32, %c0_i32_0 : i32, i32
  }
  func.func @transform_4(%arg0: i32) -> (i32, i32) {
    %c0_i32 = arith.constant 0 : i32
    %c0_i32_0 = arith.constant 0 : i32
    %c0_i32_1 = arith.constant 0 : i32
    return %c0_i32, %c0_i32_0 : i32, i32
  }
  func.func @transform_5(%arg0: i32) -> (i32, i32) {
    %c0_i32 = arith.constant 0 : i32
    %c0_i32_0 = arith.constant 0 : i32
    return %arg0, %c0_i32 : i32, i32
  }
}

</mosaic_0001>

<llo_original>
// kernel: tpu_custom_call.1
$region0: #{tpu_custom_call.1}
  #allocation0 [shape = 'u32[]', space=smem, size = 0x4, offset = 0x4, fixed_abs, tag = 'smem constant byte address 0x4 - core index']
  #allocation1 [shape = 'u32[144,128]{1,0:T(1,128)}', space=vmem, size = 0x12000, scoped, tag = 'internal scratch']
  %s0 = inlined_call_operand.hbm [shape: f32[8,16], index: 0, kind: input, shape index: {}]
  %s1 = inlined_call_operand.hbm [shape: f32[16,32], index: 1, kind: input, shape index: {}]
  %s2 = inlined_call_operand.vmem [shape: f32[1,32], index: 2, kind: input, shape index: {}]
  %s3 = inlined_call_operand.hbm [shape: f32[32,32], index: 3, kind: input, shape index: {}]
  %s4 = inlined_call_operand.vmem [shape: f32[1,32], index: 4, kind: input, shape index: {}]
  %s5 = inlined_call_operand.hbm [shape: f32[8,32], index: 5, kind: output, shape index: {}]
  %s6 = sld [smem:[#allocation0]]
  $region42: #{tpu_custom_call.1} parent=0
    _
  %s8 = ssub.s32 1, %s6
  %s9 = scalar_select 0, %s8, %s6
  $region1: #{tpu_custom_call.1} parent=0
    #allocation2 [shape = 'u8[4096]{0}', space=vmem, size = 0x1000, scoped, tag = 'input window, operand 0, single buffered']
    #allocation3 [shape = 's32[1]{0}', space=sflag, size = 0x4, scoped, tag = 'scoped memory for tpu_custom_call.1']
    #allocation4 [shape = 's32[1]{0}', space=sflag, size = 0x4, scoped, tag = 'scoped memory for tpu_custom_call.1']
    #allocation5 [shape = 'u8[8192]{0}', space=vmem, size = 0x2000, scoped, tag = 'input window, operand 1, single buffered']
    #allocation6 [shape = 's32[1]{0}', space=sflag, size = 0x4, scoped, tag = 'scoped memory for tpu_custom_call.1']
    #allocation7 [shape = 'u8[16384]{0}', space=vmem, size = 0x4000, scoped, tag = 'input window, operand 3, single buffered']
    #allocation8 [shape = 'u8[4096]{0}', space=vmem, size = 0x1000, scoped, tag = 'output window, operand 0, single buffered']
    %10 = vsyncpa [#allocation3], 0
    %11 = vsyncpa [#allocation6], 0
    %12 = vsyncpa [#allocation4], 0
    // Predicated region
    $region2: #{tpu_custom_call.1} parent=1 // pred_check
      _
    $region3: #{tpu_custom_call.1} parent=1 // pred_check_branch
      %14 = sbr.rel (0) target = $region5
    $region4: #{tpu_custom_call.1} parent=1 // pred_region
      %s16 = ssub.s32 128, 128
      %17 = vsyncadd [#allocation3], %s16
      %s19 = sshll.u32 [#allocation2], 4
      %s20 = int_to_ptr.vmem [resolvable:$true] %s19
      %22 = dma.hbm_to_vmem [thread:$0]  %s0, 128, %s20, [#allocation3]
    $region5: #{tpu_custom_call.1} parent=1 // pred_fallthru
      _
    // Predicated region
    $region6: #{tpu_custom_call.1} parent=1 // pred_check
      _
    $region7: #{tpu_custom_call.1} parent=1 // pred_check_branch
      %24 = sbr.rel (0) target = $region9
    $region8: #{tpu_custom_call.1} parent=1 // pred_region
      %s26 = ssub.s32 256, 256
      %27 = vsyncadd [#allocation6], %s26
      %s28 = sshll.u32 [#allocation5], 4
      %s29 = int_to_ptr.vmem [resolvable:$true] %s28
      %34 = dma.hbm_to_vmem [thread:$0]  %s1, 256, %s29, [#allocation6], 128, 128, 8
    $region9: #{tpu_custom_call.1} parent=1 // pred_fallthru
      _
    // Predicated region
    $region10: #{tpu_custom_call.1} parent=1 // pred_check
      _
    $region11: #{tpu_custom_call.1} parent=1 // pred_check_branch
      %36 = sbr.rel (0) target = $region13
    $region12: #{tpu_custom_call.1} parent=1 // pred_region
      _
    $region13: #{tpu_custom_call.1} parent=1 // pred_fallthru
      _
    // Predicated region
    $region14: #{tpu_custom_call.1} parent=1 // pred_check
      _
    $region15: #{tpu_custom_call.1} parent=1 // pred_check_branch
      %38 = sbr.rel (0) target = $region17
    $region16: #{tpu_custom_call.1} parent=1 // pred_region
      %s40 = ssub.s32 512, 512
      %41 = vsyncadd [#allocation6], %s40
      %s42 = sshll.u32 [#allocation7], 4
      %s43 = int_to_ptr.vmem [resolvable:$true] %s42
      %48 = dma.hbm_to_vmem [thread:$0]  %s3, 512, %s43, [#allocation6], 128, 128, 8
    $region17: #{tpu_custom_call.1} parent=1 // pred_fallthru
      _
    // Predicated region
    $region18: #{tpu_custom_call.1} parent=1 // pred_check
      _
    $region19: #{tpu_custom_call.1} parent=1 // pred_check_branch
      %50 = sbr.rel (0) target = $region21
    $region20: #{tpu_custom_call.1} parent=1 // pred_region
      _
    $region21: #{tpu_custom_call.1} parent=1 // pred_fallthru
      _
    // Predicated region
    $region22: #{tpu_custom_call.1} parent=1 // pred_check
      _
    $region23: #{tpu_custom_call.1} parent=1 // pred_check_branch
      %52 = sbr.rel (0) target = $region25
    $region24: #{tpu_custom_call.1} parent=1 // pred_region
      %53 = dma.done [#allocation3], 128
    $region25: #{tpu_custom_call.1} parent=1 // pred_fallthru
      _
    // Predicated region
    $region26: #{tpu_custom_call.1} parent=1 // pred_check
      _
    $region27: #{tpu_custom_call.1} parent=1 // pred_check_branch
      %55 = sbr.rel (0) target = $region29
    $region28: #{tpu_custom_call.1} parent=1 // pred_region
      %56 = dma.done [#allocation6], 256
    $region29: #{tpu_custom_call.1} parent=1 // pred_fallthru
      _
    // Predicated region
    $region30: #{tpu_custom_call.1} parent=1 // pred_check
      _
    $region31: #{tpu_custom_call.1} parent=1 // pred_check_branch
      %58 = sbr.rel (0) target = $region33
    $region32: #{tpu_custom_call.1} parent=1 // pred_region
      %59 = dma.done [#allocation6], 512
    $region33: #{tpu_custom_call.1} parent=1 // pred_fallthru
      _
    %v60 = vld [vmem:[#allocation2] sm:$0xff]
    %v61 = vld [vmem:[#allocation5] sm:$0xff]
    %v62 = vld [vmem:[#allocation5 + $0x8] sm:$0xff]
    %v63 = vld [vmem:[%s2] sm:$0x1]
    %v65 = vlaneseq
    %v66 = vshrl.u32 %v65, 7
    %v67 = vsub.s32 0, %v66
    %v68 = vrot.slane %v63, %v67
    %vm70 = vcmask 130048
    %v72 = vsel %vm70, %v60, 0
    %74 = vmatprep.subr.mxu0 0.0
    %75 = vmatpush1.msra.mxu0 0.0
    %76 = vmatprep.subr.mxu0 0.0
    %77 = vmatpush1.msra.mxu0 0.0
    %78 = vmatprep.subr.mxu0 0.0
    %79 = vmatpush1.msra.mxu0 0.0
    %80 = vmatprep.subr.mxu0 0.0
    %81 = vmatpush1.msra.mxu0 0.0
    %82 = vmatprep.subr.mxu0 0.0
    %83 = vmatpush1.msra.mxu0 0.0
    %84 = vmatprep.subr.mxu0 0.0
    %85 = vmatpush1.msra.mxu0 0.0
    %86 = vmatprep.subr.mxu0 0.0
    %87 = vmatpush1.msra.mxu0 0.0
    %88 = vmatprep.subr.mxu0 0.0
    %89 = vmatpush1.msra.mxu0 0.0
    %90 = vmatprep.subr.mxu0 0.0
    %91 = vmatpush1.msra.mxu0 0.0
    %92 = vmatprep.subr.mxu0 0.0
    %93 = vmatpush1.msra.mxu0 0.0
    %94 = vmatprep.subr.mxu0 0.0
    %95 = vmatpush1.msra.mxu0 0.0
    %96 = vmatprep.subr.mxu0 0.0
    %97 = vmatpush1.msra.mxu0 0.0
    %98 = vmatprep.subr.mxu0 0.0
    %99 = vmatpush1.msra.mxu0 0.0
    %100 = vmatprep.subr.mxu0 0.0
    %101 = vmatpush1.msra.mxu0 0.0
    %102 = vmatprep.subr.mxu0 0.0
    %103 = vmatpush1.msra.mxu0 %v62
    %104 = vmatprep.subr.mxu0 0.0
    %105 = vmatpush1.msra.mxu0 %v61
    %106 = vmatprep.subr.mxu0 0.0
    %107 = vmatpush2.msra.mxu0 0.0
    %108 = vmatprep.subr.mxu0 0.0
    %109 = vmatpush2.msra.mxu0 0.0
    %110 = vmatprep.subr.mxu0 0.0
    %111 = vmatpush2.msra.mxu0 0.0
    %112 = vmatprep.subr.mxu0 0.0
    %113 = vmatpush2.msra.mxu0 0.0
    %114 = vmatprep.subr.mxu0 0.0
    %115 = vmatpush2.msra.mxu0 0.0
    %116 = vmatprep.subr.mxu0 0.0
    %117 = vmatpush2.msra.mxu0 0.0
    %118 = vmatprep.subr.mxu0 0.0
    %119 = vmatpush2.msra.mxu0 0.0
    %120 = vmatprep.subr.mxu0 0.0
    %121 = vmatpush2.msra.mxu0 0.0
    %122 = vmatprep.subr.mxu0 0.0
    %123 = vmatpush2.msra.mxu0 0.0
    %124 = vmatprep.subr.mxu0 0.0
    %125 = vmatpush2.msra.mxu0 0.0
    %126 = vmatprep.subr.mxu0 0.0
    %127 = vmatpush2.msra.mxu0 0.0
    %128 = vmatprep.subr.mxu0 0.0
    %129 = vmatpush2.msra.mxu0 0.0
    %130 = vmatprep.subr.mxu0 0.0
    %131 = vmatpush2.msra.mxu0 0.0
    %132 = vmatprep.subr.mxu0 0.0
    %133 = vmatpush2.msra.mxu0 0.0
    %134 = vmatprep.subr.mxu0 0.0
    %135 = vmatpush2.msra.mxu0 0.0
    %136 = vmatprep.subr.mxu0 0.0
    %137 = vmatpush2.msra.mxu0 0.0
    %138 = vmatprep.mubr.f32.mxu0 0.0
    %139 = vmatmul.mubr.f32.gmra.mxu0 %v72
    %v140 = vpop.f32.mrf.mxu0
    %v141 = vadd.f32 %v68, %v140
    %v142 = vpop.f32.mrf.mxu0
    %143 = vdwg.mxu0
    %v144 = vmax.f32 %v141, 0.0
    %v145 = vld [vmem:[#allocation7] sm:$0xff]
    %v146 = vld [vmem:[#allocation7 + $0x8] sm:$0xff]
    %v147 = vld [vmem:[#allocation7 + $0x10] sm:$0xff]
    %v148 = vld [vmem:[#allocation7 + $0x18] sm:$0xff]
    %v149 = vld [vmem:[%s4] sm:$0x1]
    %v151 = vlaneseq
    %v152 = vshrl.u32 %v151, 7
    %v153 = vsub.s32 0, %v152
    %v154 = vrot.slane %v149, %v153
    %vm156 = vcmask 261120
    %v158 = vsel %vm156, %v144, 0
    %160 = vmatprep.subr.mxu0 0.0
    %161 = vmatpush1.msra.mxu0 0.0
    %162 = vmatprep.subr.mxu0 0.0
    %163 = vmatpush1.msra.mxu0 0.0
    %164 = vmatprep.subr.mxu0 0.0
    %165 = vmatpush1.msra.mxu0 0.0
    %166 = vmatprep.subr.mxu0 0.0
    %167 = vmatpush1.msra.mxu0 0.0
    %168 = vmatprep.subr.mxu0 0.0
    %169 = vmatpush1.msra.mxu0 0.0
    %170 = vmatprep.subr.mxu0 0.0
    %171 = vmatpush1.msra.mxu0 0.0
    %172 = vmatprep.subr.mxu0 0.0
    %173 = vmatpush1.msra.mxu0 0.0
    %174 = vmatprep.subr.mxu0 0.0
    %175 = vmatpush1.msra.mxu0 0.0
    %176 = vmatprep.subr.mxu0 0.0
    %177 = vmatpush1.msra.mxu0 0.0
    %178 = vmatprep.subr.mxu0 0.0
    %179 = vmatpush1.msra.mxu0 0.0
    %180 = vmatprep.subr.mxu0 0.0
    %181 = vmatpush1.msra.mxu0 0.0
    %182 = vmatprep.subr.mxu0 0.0
    %183 = vmatpush1.msra.mxu0 0.0
    %184 = vmatprep.subr.mxu0 0.0
    %185 = vmatpush1.msra.mxu0 %v148
    %186 = vmatprep.subr.mxu0 0.0
    %187 = vmatpush1.msra.mxu0 %v147
    %188 = vmatprep.subr.mxu0 0.0
    %189 = vmatpush1.msra.mxu0 %v146
    %190 = vmatprep.subr.mxu0 0.0
    %191 = vmatpush1.msra.mxu0 %v145
    %192 = vmatprep.subr.mxu0 0.0
    %193 = vmatpush2.msra.mxu0 0.0
    %194 = vmatprep.subr.mxu0 0.0
    %195 = vmatpush2.msra.mxu0 0.0
    %196 = vmatprep.subr.mxu0 0.0
    %197 = vmatpush2.msra.mxu0 0.0
    %198 = vmatprep.subr.mxu0 0.0
    %199 = vmatpush2.msra.mxu0 0.0
    %200 = vmatprep.subr.mxu0 0.0
    %201 = vmatpush2.msra.mxu0 0.0
    %202 = vmatprep.subr.mxu0 0.0
    %203 = vmatpush2.msra.mxu0 0.0
    %204 = vmatprep.subr.mxu0 0.0
    %205 = vmatpush2.msra.mxu0 0.0
    %206 = vmatprep.subr.mxu0 0.0
    %207 = vmatpush2.msra.mxu0 0.0
    %208 = vmatprep.subr.mxu0 0.0
    %209 = vmatpush2.msra.mxu0 0.0
    %210 = vmatprep.subr.mxu0 0.0
    %211 = vmatpush2.msra.mxu0 0.0
    %212 = vmatprep.subr.mxu0 0.0
    %213 = vmatpush2.msra.mxu0 0.0
    %214 = vmatprep.subr.mxu0 0.0
    %215 = vmatpush2.msra.mxu0 0.0
    %216 = vmatprep.subr.mxu0 0.0
    %217 = vmatpush2.msra.mxu0 0.0
    %218 = vmatprep.subr.mxu0 0.0
    %219 = vmatpush2.msra.mxu0 0.0
    %220 = vmatprep.subr.mxu0 0.0
    %221 = vmatpush2.msra.mxu0 0.0
    %222 = vmatprep.subr.mxu0 0.0
    %223 = vmatpush2.msra.mxu0 0.0
    %224 = vmatprep.mubr.f32.mxu0 0.0
    %225 = vmatmul.mubr.f32.gmra.mxu0 %v158
    %v226 = vpop.f32.mrf.mxu0
    %v227 = vadd.f32 %v154, %v226
    %v228 = vpop.f32.mrf.mxu0
    %229 = vdwg.mxu0
    %v230 = vmax.f32 %v227, 0.0
    %231 = vst.msk [vmem:[#allocation8] sm:$0xff] %vm156, %v230
    // Predicated region
    $region34: #{tpu_custom_call.1} parent=1 // pred_check
      _
    $region35: #{tpu_custom_call.1} parent=1 // pred_check_branch
      %233 = sbr.rel (0) target = $region37
    $region36: #{tpu_custom_call.1} parent=1 // pred_region
      %s235 = ssub.s32 128, 128
      %236 = vsyncadd [#allocation4], %s235
      %s238 = sshll.u32 [#allocation8], 4
      %s239 = int_to_ptr.vmem [resolvable:$true] %s238
      %241 = dma.vmem_to_hbm [thread:$0]  %s239, 128, %s5, [#allocation4]
    $region37: #{tpu_custom_call.1} parent=1 // pred_fallthru
      _
    // Predicated region
    $region38: #{tpu_custom_call.1} parent=1 // pred_check
      _
    $region39: #{tpu_custom_call.1} parent=1 // pred_check_branch
      %243 = sbr.rel (0) target = $region41
    $region40: #{tpu_custom_call.1} parent=1 // pred_region
      %244 = dma.done [#allocation4], 128
    $region41: #{tpu_custom_call.1} parent=1 // pred_fallthru
      _
    %245 = vsyncpa [#allocation3], 1
    %246 = vsyncpa [#allocation6], 1
    %247 = vsyncpa [#allocation4], 1

</llo_original>
